<compile_context>
chip_gen: v6e
topology: v6e:2x2x1
jax: 0.10.0
libtpu: 0.0.40
codegen_flags: <defaults>
</compile_context>

<pallas_src>
import jax
import jax.numpy as jnp
from jax.experimental import pallas as pl
from jax.experimental.pallas import tpu as pltpu


def _round_up(x, m):
    return ((x + m - 1) // m) * m


def qnet_kernel(x_ref, w1_ref, b1_ref, w2_ref, b2_ref, w3_ref, b3_ref, o_ref):
    # Fused 3-layer MLP on one batch tile. Matmul operands are low-precision
    # (bf16 by default -> MXU fast path); accumulation, bias add and ReLU are f32.
    mm_dtype = w1_ref.dtype
    x = x_ref[...]

    h1 = jnp.dot(x, w1_ref[...], preferred_element_type=jnp.float32) + b1_ref[...]
    h1 = jnp.maximum(h1, 0.0)

    h2 = jnp.dot(h1.astype(mm_dtype), w2_ref[...],
                 preferred_element_type=jnp.float32) + b2_ref[...]
    h2 = jnp.maximum(h2, 0.0)

    out = jnp.dot(h2.astype(mm_dtype), w3_ref[...],
                  preferred_element_type=jnp.float32) + b3_ref[...]
    o_ref[...] = out.astype(o_ref.dtype)


def qnet_forward(x, params, *, block_b=512, matmul_dtype=jnp.bfloat16):
    """x: [B, n_state_vars] float32. params: dict of transposed weights/biases."""
    w1, b1, w2, b2, w3, b3 = (
        params["w1"], params["b1"], params["w2"],
        params["b2"], params["w3"], params["b3"],
    )
    B, n_state = x.shape
    n_actions = w3.shape[1]

    # --- lane-dense output: pad the final layer to a multiple of 128 lanes ---
    n_out_p = _round_up(max(n_actions, 128), 128)
    pad_o = n_out_p - n_actions
    w3p = jnp.pad(w3, ((0, 0), (0, pad_o))) if pad_o else w3
    b3p = jnp.pad(b3, ((0, 0), (0, pad_o))) if pad_o else b3

    # --- batch tiling: grid over batch, weights resident across grid steps ---
    tb = min(_round_up(block_b, 8), _round_up(B, 8))
    b_pad = _round_up(B, tb)
    xp = jnp.pad(x, ((0, b_pad - B), (0, 0))) if b_pad != B else x
    grid = (b_pad // tb,)

    # --- low-precision matmul operands (f32 accumulation inside the kernel) ---
    xp = xp.astype(matmul_dtype)
    w1c = w1.astype(matmul_dtype)
    w2c = w2.astype(matmul_dtype)
    w3c = w3p.astype(matmul_dtype)

    const = lambda shape: pl.BlockSpec(shape, lambda i: (0, 0))

    out = pl.pallas_call(
        qnet_kernel,
        out_shape=jax.ShapeDtypeStruct((b_pad, n_out_p), jnp.float32),
        grid=grid,
        in_specs=[
            pl.BlockSpec((tb, n_state), lambda i: (i, 0)),   # x tile, pipelined
            const(w1c.shape), const(b1.shape),               # weights: resident
            const(w2c.shape), const(b2.shape),
            const(w3c.shape), const(b3p.shape),
        ],
        out_specs=pl.BlockSpec((tb, n_out_p), lambda i: (i, 0)),
        compiler_params=pltpu.CompilerParams(
            dimension_semantics=("parallel",),  # shard batch tiles across TCs (v7x)
        ),
    )(xp, w1c, b1, w2c, b2, w3c, b3p)

    return out[:B, :n_actions]


def init_qnet_params(key, n_state_vars, n_actions, dim_hidden=64):
    """torch.nn.Linear-style init (uniform +/- 1/sqrt(fan_in)).

    Weights are stored already transposed to (in, out); biases as (1, out).
    """
    def linear(key, fan_in, fan_out):
        kw, kb = jax.random.split(key)
        bound = 1.0 / jnp.sqrt(fan_in)
        w = jax.random.uniform(kw, (fan_in, fan_out), jnp.float32, -bound, bound)
        b = jax.random.uniform(kb, (1, fan_out), jnp.float32, -bound, bound)
        return w, b

    k1, k2, k3 = jax.random.split(key, 3)
    w1, b1 = linear(k1, n_state_vars, dim_hidden)
    w2, b2 = linear(k2, dim_hidden, dim_hidden)
    w3, b3 = linear(k3, dim_hidden, n_actions)
    return {"w1": w1, "b1": b1, "w2": w2, "b2": b2, "w3": w3, "b3": b3}


def qnet_reference(x, params, matmul_dtype=jnp.bfloat16):
    """Pure-JAX reference with the same bf16-operand / f32-accumulate numerics."""
    c = lambda a: a.astype(matmul_dtype)
    h1 = jnp.maximum(
        jnp.dot(c(x), c(params["w1"]), preferred_element_type=jnp.float32)
        + params["b1"], 0.0)
    h2 = jnp.maximum(
        jnp.dot(c(h1), c(params["w2"]), preferred_element_type=jnp.float32)
        + params["b2"], 0.0)
    return (jnp.dot(c(h2), c(params["w3"]), preferred_element_type=jnp.float32)
            + params["b3"])


if __name__ == "__main__":
    # Yahtzee-like shapes; batch large enough to exercise the batch grid axis
    # (grid=(2,) with block_b=256) while staying small.
    batch = 512
    n_state_vars = 16
    n_actions = 32
    dim_hidden = 64

    key = jax.random.PRNGKey(0)
    kx, kp = jax.random.split(key)
    x = jax.random.normal(kx, (batch, n_state_vars), jnp.float32)
    params = init_qnet_params(kp, n_state_vars, n_actions, dim_hidden)

    out = jax.block_until_ready(qnet_forward(x, params, block_b=256))
    ref = jax.block_until_ready(qnet_reference(x, params))

    assert out.shape == (batch, n_actions)
    assert jnp.allclose(out, ref, atol=1e-3, rtol=1e-3)

    print("KERNEL_OK")
</pallas_src>

<mosaic_0001>
module attributes {stable_mosaic.version = 11 : i64} {
  func.func @qnet_kernel(%arg0: i32, %arg1: memref<256x16xbf16, #tpu.memory_space<vmem>>, %arg2: memref<16x64xbf16, #tpu.memory_space<vmem>>, %arg3: memref<1x64xf32, #tpu.memory_space<vmem>>, %arg4: memref<64x64xbf16, #tpu.memory_space<vmem>>, %arg5: memref<1x64xf32, #tpu.memory_space<vmem>>, %arg6: memref<64x128xbf16, #tpu.memory_space<vmem>>, %arg7: memref<1x128xf32, #tpu.memory_space<vmem>>, %arg8: memref<256x128xf32, #tpu.memory_space<vmem>>) attributes {dimension_semantics = [#tpu.dimension_semantics<parallel>], iteration_bounds = array<i64: 2>, scalar_prefetch = 0 : i64, scratch_operands = 0 : i64, tpu.core_type = #tpu.core_type<tc>, window_params = [{transform_indices = @transform_0, window_bounds = array<i64: 256, 16>}, {pipeline_mode = #tpu.pipeline_mode<synchronous>, transform_indices = @transform_1, window_bounds = array<i64: 16, 64>}, {pipeline_mode = #tpu.pipeline_mode<synchronous>, transform_indices = @transform_2, window_bounds = array<i64: 1, 64>}, {pipeline_mode = #tpu.pipeline_mode<synchronous>, transform_indices = @transform_3, window_bounds = array<i64: 64, 64>}, {pipeline_mode = #tpu.pipeline_mode<synchronous>, transform_indices = @transform_4, window_bounds = array<i64: 1, 64>}, {pipeline_mode = #tpu.pipeline_mode<synchronous>, transform_indices = @transform_5, window_bounds = array<i64: 64, 128>}, {pipeline_mode = #tpu.pipeline_mode<synchronous>, transform_indices = @transform_6, window_bounds = array<i64: 1, 128>}, {transform_indices = @transform_7, window_bounds = array<i64: 256, 128>}]} {
    %c0 = arith.constant 0 : index
    %c0_0 = arith.constant 0 : index
    %0 = vector.load %arg1[%c0, %c0_0] : memref<256x16xbf16, #tpu.memory_space<vmem>>, vector<256x16xbf16>
    %c0_1 = arith.constant 0 : index
    %c0_2 = arith.constant 0 : index
    %1 = vector.load %arg2[%c0_1, %c0_2] : memref<16x64xbf16, #tpu.memory_space<vmem>>, vector<16x64xbf16>
    %cst = arith.constant dense<0.000000e+00> : vector<256x64xf32>
    %2 = tpu.matmul %0, %1, %cst {dimension_numbers = #tpu.dot_dimension_numbers<[1], [0], [0], [1], [0, 0, 1, 1], [], []>} : vector<256x16xbf16>, vector<16x64xbf16>, vector<256x64xf32> -> vector<256x64xf32>
    %c0_3 = arith.constant 0 : index
    %c0_4 = arith.constant 0 : index
    %3 = vector.load %arg3[%c0_3, %c0_4] : memref<1x64xf32, #tpu.memory_space<vmem>>, vector<1x64xf32>
    %4 = vector.broadcast %3 : vector<1x64xf32> to vector<256x64xf32>
    %5 = arith.addf %2, %4 : vector<256x64xf32>
    %cst_5 = arith.constant 0.000000e+00 : f32
    %6 = vector.broadcast %cst_5 : f32 to vector<256x64xf32>
    %7 = arith.maximumf %5, %6 : vector<256x64xf32>
    %8 = arith.truncf %7 : vector<256x64xf32> to vector<256x64xbf16>
    %c0_6 = arith.constant 0 : index
    %c0_7 = arith.constant 0 : index
    %9 = vector.load %arg4[%c0_6, %c0_7] : memref<64x64xbf16, #tpu.memory_space<vmem>>, vector<64x64xbf16>
    %cst_8 = arith.constant dense<0.000000e+00> : vector<256x64xf32>
    %10 = tpu.matmul %8, %9, %cst_8 {dimension_numbers = #tpu.dot_dimension_numbers<[1], [0], [0], [1], [0, 0, 1, 1], [], []>} : vector<256x64xbf16>, vector<64x64xbf16>, vector<256x64xf32> -> vector<256x64xf32>
    %c0_9 = arith.constant 0 : index
    %c0_10 = arith.constant 0 : index
    %11 = vector.load %arg5[%c0_9, %c0_10] : memref<1x64xf32, #tpu.memory_space<vmem>>, vector<1x64xf32>
    %12 = vector.broadcast %11 : vector<1x64xf32> to vector<256x64xf32>
    %13 = arith.addf %10, %12 : vector<256x64xf32>
    %cst_11 = arith.constant 0.000000e+00 : f32
    %14 = vector.broadcast %cst_11 : f32 to vector<256x64xf32>
    %15 = arith.maximumf %13, %14 : vector<256x64xf32>
    %16 = arith.truncf %15 : vector<256x64xf32> to vector<256x64xbf16>
    %c0_12 = arith.constant 0 : index
    %c0_13 = arith.constant 0 : index
    %17 = vector.load %arg6[%c0_12, %c0_13] : memref<64x128xbf16, #tpu.memory_space<vmem>>, vector<64x128xbf16>
    %cst_14 = arith.constant dense<0.000000e+00> : vector<256x128xf32>
    %18 = tpu.matmul %16, %17, %cst_14 {dimension_numbers = #tpu.dot_dimension_numbers<[1], [0], [0], [1], [0, 0, 1, 1], [], []>} : vector<256x64xbf16>, vector<64x128xbf16>, vector<256x128xf32> -> vector<256x128xf32>
    %c0_15 = arith.constant 0 : index
    %c0_16 = arith.constant 0 : index
    %19 = vector.load %arg7[%c0_15, %c0_16] : memref<1x128xf32, #tpu.memory_space<vmem>>, vector<1x128xf32>
    %20 = vector.broadcast %19 : vector<1x128xf32> to vector<256x128xf32>
    %21 = arith.addf %18, %20 : vector<256x128xf32>
    %c0_17 = arith.constant 0 : index
    %c0_18 = arith.constant 0 : index
    %22 = vector.load %arg8[%c0_17, %c0_18] : memref<256x128xf32, #tpu.memory_space<vmem>>, vector<256x128xf32>
    tpu.vector_store %arg8[%c0_17, %c0_18], %21 {strides = array<i32>} : memref<256x128xf32, #tpu.memory_space<vmem>>, vector<256x128xf32>,
    return
  }
  func.func @transform_0(%arg0: i32) -> (i32, i32) {
    %c0_i32 = arith.constant 0 : i32
    %c0_i32_0 = arith.constant 0 : i32
    return %arg0, %c0_i32 : i32, i32
  }
  func.func @transform_1(%arg0: i32) -> (i32, i32) {
    %c0_i32 = arith.constant 0 : i32
    %c0_i32_0 = arith.constant 0 : i32
    %c0_i32_1 = arith.constant 0 : i32
    return %c0_i32, %c0_i32_0 : i32, i32
  }
  func.func @transform_2(%arg0: i32) -> (i32, i32) {
    %c0_i32 = arith.constant 0 : i32
    %c0_i32_0 = arith.constant 0 : i32
    %c0_i32_1 = arith.constant 0 : i32
    return %c0_i32, %c0_i32_0 : i32, i32
  }
  func.func @transform_3(%arg0: i32) -> (i32, i32) {
    %c0_i32 = arith.constant 0 : i32
    %c0_i32_0 = arith.constant 0 : i32
    %c0_i32_1 = arith.constant 0 : i32
    return %c0_i32, %c0_i32_0 : i32, i32
  }
  func.func @transform_4(%arg0: i32) -> (i32, i32) {
    %c0_i32 = arith.constant 0 : i32
    %c0_i32_0 = arith.constant 0 : i32
    %c0_i32_1 = arith.constant 0 : i32
    return %c0_i32, %c0_i32_0 : i32, i32
  }
  func.func @transform_5(%arg0: i32) -> (i32, i32) {
    %c0_i32 = arith.constant 0 : i32
    %c0_i32_0 = arith.constant 0 : i32
    %c0_i32_1 = arith.constant 0 : i32
    return %c0_i32, %c0_i32_0 : i32, i32
  }
  func.func @transform_6(%arg0: i32) -> (i32, i32) {
    %c0_i32 = arith.constant 0 : i32
    %c0_i32_0 = arith.constant 0 : i32
    %c0_i32_1 = arith.constant 0 : i32
    return %c0_i32, %c0_i32_0 : i32, i32
  }
  func.func @transform_7(%arg0: i32) -> (i32, i32) {
    %c0_i32 = arith.constant 0 : i32
    %c0_i32_0 = arith.constant 0 : i32
    return %arg0, %c0_i32 : i32, i32
  }
}

</mosaic_0001>

<llo_original>
// kernel: tpu_custom_call.1
$region0: #{tpu_custom_call.1}
  #allocation0 [shape = 'u32[]', space=smem, size = 0x4, offset = 0x4, fixed_abs, tag = 'smem constant byte address 0x4 - core index']
  #allocation1 [shape = 'u32[144,128]{1,0:T(1,128)}', space=vmem, size = 0x12000, scoped, tag = 'internal scratch']
  %s0 = inlined_call_operand.vmem [shape: bf16[512,16], index: 0, kind: input, shape index: {}]
  %s1 = inlined_call_operand.vmem [shape: bf16[16,64], index: 1, kind: input, shape index: {}]
  %s2 = inlined_call_operand.vmem [shape: f32[1,64], index: 2, kind: input, shape index: {}]
  %s3 = inlined_call_operand.vmem [shape: bf16[64,64], index: 3, kind: input, shape index: {}]
  %s4 = inlined_call_operand.vmem [shape: f32[1,64], index: 4, kind: input, shape index: {}]
  %s5 = inlined_call_operand.vmem [shape: bf16[64,128], index: 5, kind: input, shape index: {}]
  %s6 = inlined_call_operand.vmem [shape: f32[1,128], index: 6, kind: input, shape index: {}]
  %s7 = inlined_call_operand.hbm [shape: f32[512,128], index: 7, kind: output, shape index: {}]
  %s8 = sld [smem:[#allocation0]]
  $region61: #{tpu_custom_call.1} parent=0
    _
  %s10 = ssub.s32 1, %s8
  %s11 = scalar_select 0, %s10, %s8
  $region1: #{tpu_custom_call.1} parent=0
    #allocation2 [shape = 'u8[262144]{0}', space=vmem, size = 0x40000, scoped, tag = 'output window, operand 0']
    #allocation3 [shape = 's32[2]{0}', space=sflag, size = 0x8, scoped, tag = 'scoped memory for tpu_custom_call.1']
    %12 = vsyncpa [#allocation3], 0
    %s13 = scalar_lea.sflag [#allocation3], 1
    %14 = vsyncpa %s13, 0
    loop: start=0, step=1, limit=4
    $region2: #{tpu_custom_call.1} parent=1 // loop_pre_header
      _
    $region3: #{tpu_custom_call.1} parent=1 // loop_header
      %s16 = sphi 0, %s20
      %p17 = scmp.ge.s32.totalorder %s16, 4
      %s26 = sphi 0, %s28
      %s29 = sphi 0, %s26
      %s30 = sphi 0, %s29
      %s46 = sphi 0, %s30
      %s50 = sphi 0, %s50
      %s52 = sphi 0, %s50
      %s53 = sphi 0, %s52
      %s67 = sphi 0, %s53
      %s71 = sphi 0, %s71
      %s73 = sphi 0, %s71
      %s74 = sphi 0, %s73
      %s88 = sphi 0, %s74
      %s92 = sphi 0, %s92
      %s94 = sphi 0, %s92
      %s95 = sphi 0, %s94
      %s109 = sphi 0, %s95
      %s113 = sphi 0, %s113
      %s115 = sphi 0, %s113
      %s116 = sphi 0, %s115
      %s130 = sphi 0, %s116
      %s134 = sphi 0, %s134
      %s136 = sphi 0, %s134
      %s137 = sphi 0, %s136
      %s151 = sphi 0, %s137
      %s155 = sphi 0, %s155
      %s157 = sphi 0, %s155
      %s158 = sphi 0, %s157
      %s172 = sphi 0, %s158
      %s178 = sphi 0, %s180
      %s181 = sphi 0, %s178
      %s182 = sphi 0, %s181
      %s198 = sphi 0, %s182
    $region4: #{tpu_custom_call.1} parent=1 // loop_header_branch
      %19 = sbr.rel (%p17) target = $region8
    $region5: #{tpu_custom_call.1} parent=1 // loop_body
      %s21 = ssub.s32 %s16, 1
      %s22 = ssub.s32 %s16, 2
      %s23 = sadd.s32 %s16, 1
      %s24 = ssub.s32 %s16, %s23
      %p25 = scmp.eq.s32.totalorder %s24, 0
      %s27 = sadd.s32 %s26, 1
      %s28 = scalar_select %p25, %s26, %s27
      %p31 = pneg %p25
      %p32 = scmp.eq.s32.totalorder %s16, 1
      %p33 = por %p31, %p32
      %p34 = scmp.ne.s32.totalorder %s26, %s29
      %p35 = scmp.eq.s32.totalorder %s16, 0
      %p36 = por %p34, %p35
      %p37 = scmp.ne.s32.totalorder %s26, %s29
      %p38 = scmp.eq.s32.totalorder %s21, 1
      %p39 = por %p37, %p38
      %p40 = scmp.ne.s32.totalorder %s29, %s30
      %p41 = scmp.eq.s32.totalorder %s21, 0
      %p42 = por %p40, %p41
      %p43 = scmp.ne.s32.totalorder %s29, %s30
      %p44 = scmp.eq.s32.totalorder %s22, 1
      %p45 = por %p43, %p44
      %p47 = scmp.ne.s32.totalorder %s30, %s46
      %p48 = scmp.eq.s32.totalorder %s22, 0
      %p49 = por %p47, %p48
      %s51 = sadd.s32 %s50, 1
      %p54 = scmp.eq.s32.totalorder %s16, 1
      %p55 = scmp.ne.s32.totalorder %s50, %s52
      %p56 = scmp.eq.s32.totalorder %s16, 0
      %p57 = por %p55, %p56
      %p58 = scmp.ne.s32.totalorder %s50, %s52
      %p59 = scmp.eq.s32.totalorder %s21, 1
      %p60 = por %p58, %p59
      %p61 = scmp.ne.s32.totalorder %s52, %s53
      %p62 = scmp.eq.s32.totalorder %s21, 0
      %p63 = por %p61, %p62
      %p64 = scmp.ne.s32.totalorder %s52, %s53
      %p65 = scmp.eq.s32.totalorder %s22, 1
      %p66 = por %p64, %p65
      %p68 = scmp.ne.s32.totalorder %s53, %s67
      %p69 = scmp.eq.s32.totalorder %s22, 0
      %p70 = por %p68, %p69
      %s72 = sadd.s32 %s71, 1
      %p75 = scmp.eq.s32.totalorder %s16, 1
      %p76 = scmp.ne.s32.totalorder %s71, %s73
      %p77 = scmp.eq.s32.totalorder %s16, 0
      %p78 = por %p76, %p77
      %p79 = scmp.ne.s32.totalorder %s71, %s73
      %p80 = scmp.eq.s32.totalorder %s21, 1
      %p81 = por %p79, %p80
      %p82 = scmp.ne.s32.totalorder %s73, %s74
      %p83 = scmp.eq.s32.totalorder %s21, 0
      %p84 = por %p82, %p83
      %p85 = scmp.ne.s32.totalorder %s73, %s74
      %p86 = scmp.eq.s32.totalorder %s22, 1
      %p87 = por %p85, %p86
      %p89 = scmp.ne.s32.totalorder %s74, %s88
      %p90 = scmp.eq.s32.totalorder %s22, 0
      %p91 = por %p89, %p90
      %s93 = sadd.s32 %s92, 1
      %p96 = scmp.eq.s32.totalorder %s16, 1
      %p97 = scmp.ne.s32.totalorder %s92, %s94
      %p98 = scmp.eq.s32.totalorder %s16, 0
      %p99 = por %p97, %p98
      %p100 = scmp.ne.s32.totalorder %s92, %s94
      %p101 = scmp.eq.s32.totalorder %s21, 1
      %p102 = por %p100, %p101
      %p103 = scmp.ne.s32.totalorder %s94, %s95
      %p104 = scmp.eq.s32.totalorder %s21, 0
      %p105 = por %p103, %p104
      %p106 = scmp.ne.s32.totalorder %s94, %s95
      %p107 = scmp.eq.s32.totalorder %s22, 1
      %p108 = por %p106, %p107
      %p110 = scmp.ne.s32.totalorder %s95, %s109
      %p111 = scmp.eq.s32.totalorder %s22, 0
      %p112 = por %p110, %p111
      %s114 = sadd.s32 %s113, 1
      %p117 = scmp.eq.s32.totalorder %s16, 1
      %p118 = scmp.ne.s32.totalorder %s113, %s115
      %p119 = scmp.eq.s32.totalorder %s16, 0
      %p120 = por %p118, %p119
      %p121 = scmp.ne.s32.totalorder %s113, %s115
      %p122 = scmp.eq.s32.totalorder %s21, 1
      %p123 = por %p121, %p122
      %p124 = scmp.ne.s32.totalorder %s115, %s116
      %p125 = scmp.eq.s32.totalorder %s21, 0
      %p126 = por %p124, %p125
      %p127 = scmp.ne.s32.totalorder %s115, %s116
      %p128 = scmp.eq.s32.totalorder %s22, 1
      %p129 = por %p127, %p128
      %p131 = scmp.ne.s32.totalorder %s116, %s130
      %p132 = scmp.eq.s32.totalorder %s22, 0
      %p133 = por %p131, %p132
      %s135 = sadd.s32 %s134, 1
      %p138 = scmp.eq.s32.totalorder %s16, 1
      %p139 = scmp.ne.s32.totalorder %s134, %s136
      %p140 = scmp.eq.s32.totalorder %s16, 0
      %p141 = por %p139, %p140
      %p142 = scmp.ne.s32.totalorder %s134, %s136
      %p143 = scmp.eq.s32.totalorder %s21, 1
      %p144 = por %p142, %p143
      %p145 = scmp.ne.s32.totalorder %s136, %s137
      %p146 = scmp.eq.s32.totalorder %s21, 0
      %p147 = por %p145, %p146
      %p148 = scmp.ne.s32.totalorder %s136, %s137
      %p149 = scmp.eq.s32.totalorder %s22, 1
      %p150 = por %p148, %p149
      %p152 = scmp.ne.s32.totalorder %s137, %s151
      %p153 = scmp.eq.s32.totalorder %s22, 0
      %p154 = por %p152, %p153
      %s156 = sadd.s32 %s155, 1
      %p159 = scmp.eq.s32.totalorder %s16, 1
      %p160 = scmp.ne.s32.totalorder %s155, %s157
      %p161 = scmp.eq.s32.totalorder %s16, 0
      %p162 = por %p160, %p161
      %p163 = scmp.ne.s32.totalorder %s155, %s157
      %p164 = scmp.eq.s32.totalorder %s21, 1
      %p165 = por %p163, %p164
      %p166 = scmp.ne.s32.totalorder %s157, %s158
      %p167 = scmp.eq.s32.totalorder %s21, 0
      %p168 = por %p166, %p167
      %p169 = scmp.ne.s32.totalorder %s157, %s158
      %p170 = scmp.eq.s32.totalorder %s22, 1
      %p171 = por %p169, %p170
      %p173 = scmp.ne.s32.totalorder %s158, %s172
      %p174 = scmp.eq.s32.totalorder %s22, 0
      %p175 = por %p173, %p174
      %s176 = ssub.s32 %s16, %s23
      %p177 = scmp.eq.s32.totalorder %s176, 0
      %s179 = sadd.s32 %s178, 1
      %s180 = scalar_select %p177, %s178, %s179
      %p183 = pneg %p177
      %p184 = scmp.eq.s32.totalorder %s16, 1
      %p185 = por %p183, %p184
      %p186 = scmp.ne.s32.totalorder %s178, %s181
      %p187 = scmp.eq.s32.totalorder %s16, 0
      %p188 = por %p186, %p187
      %p189 = scmp.ne.s32.totalorder %s178, %s181
      %p190 = scmp.eq.s32.totalorder %s21, 1
      %p191 = por %p189, %p190
      %p192 = scmp.ne.s32.totalorder %s181, %s182
      %p193 = scmp.eq.s32.totalorder %s21, 0
      %p194 = por %p192, %p193
      %p195 = scmp.ne.s32.totalorder %s181, %s182
      %p196 = scmp.eq.s32.totalorder %s22, 1
      %p197 = por %p195, %p196
      %p199 = scmp.ne.s32.totalorder %s182, %s198
      %p200 = scmp.eq.s32.totalorder %s22, 0
      %p201 = por %p199, %p200
      %p202 = scmp.le.s32.totalorder 1, %s16
      %p203 = scmp.lt.s32.totalorder %s16, 3
      %p204 = pnand %p202, %p203
      %p205 = pneg %p204
      // Predicated region
      $region9: #{tpu_custom_call.1} parent=5 // pred_check
        _
      $region10: #{tpu_custom_call.1} parent=5 // pred_check_branch
        %207 = sbr.rel (%p204) target = $region12
      $region11: #{tpu_custom_call.1} parent=5 // pred_region
        %s208 = ssub.s32 %s16, 1
        // Predicated region
        $region13: #{tpu_custom_call.1} parent=11 // pred_check
          %p209 = pneg %p63
        $region14: #{tpu_custom_call.1} parent=11 // pred_check_branch
          %211 = sbr.rel (%p209) target = $region16
        $region15: #{tpu_custom_call.1} parent=11 // pred_region
          _
        $region16: #{tpu_custom_call.1} parent=11 // pred_fallthru
          _
        // Predicated region
        $region17: #{tpu_custom_call.1} parent=11 // pred_check
          %p212 = pneg %p84
        $region18: #{tpu_custom_call.1} parent=11 // pred_check_branch
          %214 = sbr.rel (%p212) target = $region20
        $region19: #{tpu_custom_call.1} parent=11 // pred_region
          _
        $region20: #{tpu_custom_call.1} parent=11 // pred_fallthru
          _
        // Predicated region
        $region21: #{tpu_custom_call.1} parent=11 // pred_check
          %p215 = pneg %p105
        $region22: #{tpu_custom_call.1} parent=11 // pred_check_branch
          %217 = sbr.rel (%p215) target = $region24
        $region23: #{tpu_custom_call.1} parent=11 // pred_region
          _
        $region24: #{tpu_custom_call.1} parent=11 // pred_fallthru
          _
        // Predicated region
        $region25: #{tpu_custom_call.1} parent=11 // pred_check
          %p218 = pneg %p126
        $region26: #{tpu_custom_call.1} parent=11 // pred_check_branch
          %220 = sbr.rel (%p218) target = $region28
        $region27: #{tpu_custom_call.1} parent=11 // pred_region
          _
        $region28: #{tpu_custom_call.1} parent=11 // pred_fallthru
          _
        // Predicated region
        $region29: #{tpu_custom_call.1} parent=11 // pred_check
          %p221 = pneg %p147
        $region30: #{tpu_custom_call.1} parent=11 // pred_check_branch
          %223 = sbr.rel (%p221) target = $region32
        $region31: #{tpu_custom_call.1} parent=11 // pred_region
          _
        $region32: #{tpu_custom_call.1} parent=11 // pred_fallthru
          _
        // Predicated region
        $region33: #{tpu_custom_call.1} parent=11 // pred_check
          %p224 = pneg %p168
        $region34: #{tpu_custom_call.1} parent=11 // pred_check_branch
          %226 = sbr.rel (%p224) target = $region36
        $region35: #{tpu_custom_call.1} parent=11 // pred_region
          _
        $region36: #{tpu_custom_call.1} parent=11 // pred_fallthru
          _
      $region12: #{tpu_custom_call.1} parent=5 // pred_fallthru
        _
      %p227 = scmp.lt.s32.totalorder %s16, 2
      // Predicated region
      $region37: #{tpu_custom_call.1} parent=5 // pred_check
        %p228 = pneg %p227
      $region38: #{tpu_custom_call.1} parent=5 // pred_check_branch
        %230 = sbr.rel (%p228) target = $region40
      $region39: #{tpu_custom_call.1} parent=5 // pred_region
        // Predicated region
        $region41: #{tpu_custom_call.1} parent=39 // pred_check
          %p231 = pneg %p36
        $region42: #{tpu_custom_call.1} parent=39 // pred_check_branch
          %233 = sbr.rel (%p231) target = $region44
        $region43: #{tpu_custom_call.1} parent=39 // pred_region
          %s234 = smul.u32 32, %s16
          %p235 = scmp.lt.s32.totalorder %s234, 63
          %s236 = scalar_select %p235, %s234, 63
          %s237 = smul.addr %s236, 4
          %s238 = scalar_lea.vmem %s0, %s237
          %s239 = smul.u32 32, %s16
        $region44: #{tpu_custom_call.1} parent=39 // pred_fallthru
          _
      $region40: #{tpu_custom_call.1} parent=5 // pred_fallthru
        _
      %p240 = scmp.le.s32.totalorder 1, %s16
      %p241 = scmp.lt.s32.totalorder %s16, 3
      %p242 = pnand %p240, %p241
      %p243 = pneg %p242
      // Predicated region
      $region45: #{tpu_custom_call.1} parent=5 // pred_check
        _
      $region46: #{tpu_custom_call.1} parent=5 // pred_check_branch
        %245 = sbr.rel (%p242) target = $region48
      $region47: #{tpu_custom_call.1} parent=5 // pred_region
        %s246 = ssub.s32 %s16, 1
        %s247 = smul.u32 32, %s21
        %p248 = scmp.lt.s32.totalorder %s247, 63
        %s249 = scalar_select %p248, %s247, 63
        %s250 = smul.addr %s249, 4
        %s251 = scalar_lea.vmem %s0, %s250
        %p252 = pneg %p42
        %p253 = pneg %p39
        %p254 = pneg %p63
        %p255 = pneg %p60
        %p256 = pneg %p84
        %p257 = pneg %p81
        %p258 = pneg %p105
        %p259 = pneg %p102
        %p260 = pneg %p126
        %p261 = pneg %p123
        %p262 = pneg %p147
        %p263 = pneg %p144
        %p264 = pneg %p168
        %p265 = pneg %p165
        %p266 = pneg %p194
        %p267 = pneg %p191
        %s268 = sand.u32 %s181, 1
        %s269 = scalar_lea.sflag [#allocation3], %s268
        %s270 = sand.u32 %s181, 1
        %s271 = smul.addr %s270, 256
        %s272 = scalar_lea.vmem [#allocation2], %s271
        %s273 = smul.u32 32, %s21
        %p274 = scmp.lt.s32.totalorder %s273, 63
        %s275 = scalar_select %p274, %s273, 63
        %s276 = smul.addr %s275, 4
        %s277 = scalar_lea.vmem %s0, %s276
        %s278 = smul.u32 32, %s21
        %s279 = smul.u32 32, %s21
        %v281 = vld [vmem:[%s277] sm:$0xf]
        %v282 = vld [vmem:[%s277 + $0x4] sm:$0xf]
        %v283 = vld [vmem:[%s277 + $0x8] sm:$0xf]
        %v284 = vld [vmem:[%s277 + $0xc] sm:$0xf]
        %v285 = vld [vmem:[%s277 + $0x10] sm:$0xf]
        %v286 = vld [vmem:[%s277 + $0x14] sm:$0xf]
        %v287 = vld [vmem:[%s277 + $0x18] sm:$0xf]
        %v288 = vld [vmem:[%s277 + $0x1c] sm:$0xf]
        %v289 = vld [vmem:[%s277 + $0x20] sm:$0xf]
        %v290 = vld [vmem:[%s277 + $0x24] sm:$0xf]
        %v291 = vld [vmem:[%s277 + $0x28] sm:$0xf]
        %v292 = vld [vmem:[%s277 + $0x2c] sm:$0xf]
        %v293 = vld [vmem:[%s277 + $0x30] sm:$0xf]
        %v294 = vld [vmem:[%s277 + $0x34] sm:$0xf]
        %v295 = vld [vmem:[%s277 + $0x38] sm:$0xf]
        %v296 = vld [vmem:[%s277 + $0x3c] sm:$0xf]
        %v297 = vld [vmem:[%s277 + $0x40] sm:$0xf]
        %v298 = vld [vmem:[%s277 + $0x44] sm:$0xf]
        %v299 = vld [vmem:[%s277 + $0x48] sm:$0xf]
        %v300 = vld [vmem:[%s277 + $0x4c] sm:$0xf]
        %v301 = vld [vmem:[%s277 + $0x50] sm:$0xf]
        %v302 = vld [vmem:[%s277 + $0x54] sm:$0xf]
        %v303 = vld [vmem:[%s277 + $0x58] sm:$0xf]
        %v304 = vld [vmem:[%s277 + $0x5c] sm:$0xf]
        %v305 = vld [vmem:[%s277 + $0x60] sm:$0xf]
        %v306 = vld [vmem:[%s277 + $0x64] sm:$0xf]
        %v307 = vld [vmem:[%s277 + $0x68] sm:$0xf]
        %v308 = vld [vmem:[%s277 + $0x6c] sm:$0xf]
        %v309 = vld [vmem:[%s277 + $0x70] sm:$0xf]
        %v310 = vld [vmem:[%s277 + $0x74] sm:$0xf]
        %v311 = vld [vmem:[%s277 + $0x78] sm:$0xf]
        %v312 = vld [vmem:[%s277 + $0x7c] sm:$0xf]
        %v313 = vld [vmem:[%s1] sm:$0xf]
        %v314 = vld [vmem:[%s1 + $0x4] sm:$0xf]
        %v315 = vld [vmem:[%s2] sm:$0x1]
        %v317 = vlaneseq
        %v318 = vshrl.u32 %v317, 7
        %v319 = vsub.s32 0, %v318
        %v320 = vrot.slane %v315, %v319
        %v354 = vunpack.c.l.b16 %v281
        %v355 = vunpack.c.l.b16 %v282
        %v356 = vunpack.c.l.b16 %v283
        %v357 = vunpack.c.l.b16 %v284
        %v358 = vunpack.c.l.b16 %v285
        %v359 = vunpack.c.l.b16 %v286
        %v360 = vunpack.c.l.b16 %v287
        %v361 = vunpack.c.l.b16 %v288
        %v362 = vunpack.c.l.b16 %v289
        %v363 = vunpack.c.l.b16 %v290
        %v364 = vunpack.c.l.b16 %v291
        %v365 = vunpack.c.l.b16 %v292
        %v366 = vunpack.c.l.b16 %v293
        %v367 = vunpack.c.l.b16 %v294
        %v368 = vunpack.c.l.b16 %v295
        %v369 = vunpack.c.l.b16 %v296
        %v370 = vunpack.c.l.b16 %v297
        %v371 = vunpack.c.l.b16 %v298
        %v372 = vunpack.c.l.b16 %v299
        %v373 = vunpack.c.l.b16 %v300
        %v374 = vunpack.c.l.b16 %v301
        %v375 = vunpack.c.l.b16 %v302
        %v376 = vunpack.c.l.b16 %v303
        %v377 = vunpack.c.l.b16 %v304
        %v378 = vunpack.c.l.b16 %v305
        %v379 = vunpack.c.l.b16 %v306
        %v380 = vunpack.c.l.b16 %v307
        %v381 = vunpack.c.l.b16 %v308
        %v382 = vunpack.c.l.b16 %v309
        %v383 = vunpack.c.l.b16 %v310
        %v384 = vunpack.c.l.b16 %v311
        %v385 = vunpack.c.l.b16 %v312
        %v386 = vpack.c.b16 %v355, %v354
        %v387 = vpack.c.b16 %v357, %v356
        %v388 = vpack.c.b16 %v359, %v358
        %v389 = vpack.c.b16 %v361, %v360
        %v390 = vpack.c.b16 %v363, %v362
        %v391 = vpack.c.b16 %v365, %v364
        %v392 = vpack.c.b16 %v367, %v366
        %v393 = vpack.c.b16 %v369, %v368
        %v394 = vpack.c.b16 %v371, %v370
        %v395 = vpack.c.b16 %v373, %v372
        %v396 = vpack.c.b16 %v375, %v374
        %v397 = vpack.c.b16 %v377, %v376
        %v398 = vpack.c.b16 %v379, %v378
        %v399 = vpack.c.b16 %v381, %v380
        %v400 = vpack.c.b16 %v383, %v382
        %v401 = vpack.c.b16 %v385, %v384
        %v404 = vunpack.c.l.b16 %v313
        %v405 = vunpack.c.l.b16 %v314
        %v406 = vpack.c.b16 %v405, %v404
        %vm408 = vcmask 130048
        %v410 = vsel %vm408, %v386, 0
        %v413 = vsel %vm408, %v387, 0
        %v416 = vsel %vm408, %v388, 0
        %v419 = vsel %vm408, %v389, 0
        %v422 = vsel %vm408, %v390, 0
        %v425 = vsel %vm408, %v391, 0
        %v428 = vsel %vm408, %v392, 0
        %v431 = vsel %vm408, %v393, 0
        %v434 = vsel %vm408, %v394, 0
        %v437 = vsel %vm408, %v395, 0
        %v440 = vsel %vm408, %v396, 0
        %v443 = vsel %vm408, %v397, 0
        %v446 = vsel %vm408, %v398, 0
        %v449 = vsel %vm408, %v399, 0
        %v452 = vsel %vm408, %v400, 0
        %v455 = vsel %vm408, %v401, 0
        %457 = vmatprep.subr.bf16.mxu0 0
        %458 = vmatpush1.bf16.msra.mxu0 0
        %459 = vmatprep.subr.bf16.mxu0 0
        %460 = vmatpush1.bf16.msra.mxu0 0
        %461 = vmatprep.subr.bf16.mxu0 0
        %462 = vmatpush1.bf16.msra.mxu0 0
        %463 = vmatprep.subr.bf16.mxu0 0
        %464 = vmatpush1.bf16.msra.mxu0 0
        %465 = vmatprep.subr.bf16.mxu0 0
        %466 = vmatpush1.bf16.msra.mxu0 0
        %467 = vmatprep.subr.bf16.mxu0 0
        %468 = vmatpush1.bf16.msra.mxu0 0
        %469 = vmatprep.subr.bf16.mxu0 0
        %470 = vmatpush1.bf16.msra.mxu0 0
        %471 = vmatprep.subr.bf16.mxu0 0
        %472 = vmatpush1.bf16.msra.mxu0 %v406
        %473 = vmatprep.subr.bf16.mxu0 0
        %474 = vmatpush2.bf16.msra.mxu0 0
        %475 = vmatprep.subr.bf16.mxu0 0
        %476 = vmatpush2.bf16.msra.mxu0 0
        %477 = vmatprep.subr.bf16.mxu0 0
        %478 = vmatpush2.bf16.msra.mxu0 0
        %479 = vmatprep.subr.bf16.mxu0 0
        %480 = vmatpush2.bf16.msra.mxu0 0
        %481 = vmatprep.subr.bf16.mxu0 0
        %482 = vmatpush2.bf16.msra.mxu0 0
        %483 = vmatprep.subr.bf16.mxu0 0
        %484 = vmatpush2.bf16.msra.mxu0 0
        %485 = vmatprep.subr.bf16.mxu0 0
        %486 = vmatpush2.bf16.msra.mxu0 0
        %487 = vmatprep.subr.bf16.mxu0 0
        %488 = vmatpush2.bf16.msra.mxu0 0
        %489 = vmatprep.mubr.bf16.mxu0 0
        %490 = vmatmul.mubr.bf16.gmra.mxu0 %v410
        %v491 = vpop.f32.mrf.mxu0
        %v492 = vadd.f32 %v320, %v491
        %v493 = vpop.f32.mrf.mxu0
        %v494 = vpop.f32.mrf.mxu0
        %v495 = vadd.f32 %v320, %v494
        %v496 = vpop.f32.mrf.mxu0
        %497 = vmatprep.mubr.bf16.mxu0 0
        %498 = vmatmul.mubr.bf16.gmra.mxu0 %v413
        %v499 = vpop.f32.mrf.mxu0
        %v500 = vadd.f32 %v320, %v499
        %v501 = vpop.f32.mrf.mxu0
        %v502 = vpop.f32.mrf.mxu0
        %v503 = vadd.f32 %v320, %v502
        %v504 = vpop.f32.mrf.mxu0
        %505 = vmatprep.mubr.bf16.mxu0 0
        %506 = vmatmul.mubr.bf16.gmra.mxu0 %v416
        %v507 = vpop.f32.mrf.mxu0
        %v508 = vadd.f32 %v320, %v507
        %v509 = vpop.f32.mrf.mxu0
        %v510 = vpop.f32.mrf.mxu0
        %v511 = vadd.f32 %v320, %v510
        %v512 = vpop.f32.mrf.mxu0
        %513 = vmatprep.mubr.bf16.mxu0 0
        %514 = vmatmul.mubr.bf16.gmra.mxu0 %v419
        %v515 = vpop.f32.mrf.mxu0
        %v516 = vadd.f32 %v320, %v515
        %v517 = vpop.f32.mrf.mxu0
        %v518 = vpop.f32.mrf.mxu0
        %v519 = vadd.f32 %v320, %v518
        %v520 = vpop.f32.mrf.mxu0
        %521 = vmatprep.mubr.bf16.mxu0 0
        %522 = vmatmul.mubr.bf16.gmra.mxu0 %v422
        %v523 = vpop.f32.mrf.mxu0
        %v524 = vadd.f32 %v320, %v523
        %v525 = vpop.f32.mrf.mxu0
        %v526 = vpop.f32.mrf.mxu0
        %v527 = vadd.f32 %v320, %v526
        %v528 = vpop.f32.mrf.mxu0
        %529 = vmatprep.mubr.bf16.mxu0 0
        %530 = vmatmul.mubr.bf16.gmra.mxu0 %v425
        %v531 = vpop.f32.mrf.mxu0
        %v532 = vadd.f32 %v320, %v531
        %v533 = vpop.f32.mrf.mxu0
        %v534 = vpop.f32.mrf.mxu0
        %v535 = vadd.f32 %v320, %v534
        %v536 = vpop.f32.mrf.mxu0
        %537 = vmatprep.mubr.bf16.mxu0 0
        %538 = vmatmul.mubr.bf16.gmra.mxu0 %v428
        %v539 = vpop.f32.mrf.mxu0
        %v540 = vadd.f32 %v320, %v539
        %v541 = vpop.f32.mrf.mxu0
        %v542 = vpop.f32.mrf.mxu0
        %v543 = vadd.f32 %v320, %v542
        %v544 = vpop.f32.mrf.mxu0
        %545 = vmatprep.mubr.bf16.mxu0 0
        %546 = vmatmul.mubr.bf16.gmra.mxu0 %v431
        %v547 = vpop.f32.mrf.mxu0
        %v548 = vadd.f32 %v320, %v547
        %v549 = vpop.f32.mrf.mxu0
        %v550 = vpop.f32.mrf.mxu0
        %v551 = vadd.f32 %v320, %v550
        %v552 = vpop.f32.mrf.mxu0
        %553 = vmatprep.mubr.bf16.mxu0 0
        %554 = vmatmul.mubr.bf16.gmra.mxu0 %v434
        %v555 = vpop.f32.mrf.mxu0
        %v556 = vadd.f32 %v320, %v555
        %v557 = vpop.f32.mrf.mxu0
        %v558 = vpop.f32.mrf.mxu0
        %v559 = vadd.f32 %v320, %v558
        %v560 = vpop.f32.mrf.mxu0
        %561 = vmatprep.mubr.bf16.mxu0 0
        %562 = vmatmul.mubr.bf16.gmra.mxu0 %v437
        %v563 = vpop.f32.mrf.mxu0
        %v564 = vadd.f32 %v320, %v563
        %v565 = vpop.f32.mrf.mxu0
        %v566 = vpop.f32.mrf.mxu0
        %v567 = vadd.f32 %v320, %v566
        %v568 = vpop.f32.mrf.mxu0
        %569 = vmatprep.mubr.bf16.mxu0 0
        %570 = vmatmul.mubr.bf16.gmra.mxu0 %v440
        %v571 = vpop.f32.mrf.mxu0
        %v572 = vadd.f32 %v320, %v571
        %v573 = vpop.f32.mrf.mxu0
        %v574 = vpop.f32.mrf.mxu0
        %v575 = vadd.f32 %v320, %v574
        %v576 = vpop.f32.mrf.mxu0
        %577 = vmatprep.mubr.bf16.mxu0 0
        %578 = vmatmul.mubr.bf16.gmra.mxu0 %v443
        %v579 = vpop.f32.mrf.mxu0
        %v580 = vadd.f32 %v320, %v579
        %v581 = vpop.f32.mrf.mxu0
        %v582 = vpop.f32.mrf.mxu0
        %v583 = vadd.f32 %v320, %v582
        %v584 = vpop.f32.mrf.mxu0
        %585 = vmatprep.mubr.bf16.mxu0 0
        %586 = vmatmul.mubr.bf16.gmra.mxu0 %v446
        %v587 = vpop.f32.mrf.mxu0
        %v588 = vadd.f32 %v320, %v587
        %v589 = vpop.f32.mrf.mxu0
        %v590 = vpop.f32.mrf.mxu0
        %v591 = vadd.f32 %v320, %v590
        %v592 = vpop.f32.mrf.mxu0
        %593 = vmatprep.mubr.bf16.mxu0 0
        %594 = vmatmul.mubr.bf16.gmra.mxu0 %v449
        %v595 = vpop.f32.mrf.mxu0
        %v596 = vadd.f32 %v320, %v595
        %v597 = vpop.f32.mrf.mxu0
        %v598 = vpop.f32.mrf.mxu0
        %v599 = vadd.f32 %v320, %v598
        %v600 = vpop.f32.mrf.mxu0
        %601 = vmatprep.mubr.bf16.mxu0 0
        %602 = vmatmul.mubr.bf16.gmra.mxu0 %v452
        %v603 = vpop.f32.mrf.mxu0
        %v604 = vadd.f32 %v320, %v603
        %v605 = vpop.f32.mrf.mxu0
        %v606 = vpop.f32.mrf.mxu0
        %v607 = vadd.f32 %v320, %v606
        %v608 = vpop.f32.mrf.mxu0
        %609 = vmatprep.mubr.bf16.mxu0 0
        %610 = vmatmul.mubr.bf16.gmra.mxu0 %v455
        %v611 = vpop.f32.mrf.mxu0
        %v612 = vadd.f32 %v320, %v611
        %v613 = vpop.f32.mrf.mxu0
        %v614 = vpop.f32.mrf.mxu0
        %v615 = vadd.f32 %v320, %v614
        %v616 = vpop.f32.mrf.mxu0
        %617 = vdwg.mxu0
        %v618 = vmax.f32 %v492, 0.0
        %v619 = vmax.f32 %v495, 0.0
        %v620 = vmax.f32 %v500, 0.0
        %v621 = vmax.f32 %v503, 0.0
        %v622 = vmax.f32 %v508, 0.0
        %v623 = vmax.f32 %v511, 0.0
        %v624 = vmax.f32 %v516, 0.0
        %v625 = vmax.f32 %v519, 0.0
        %v626 = vmax.f32 %v524, 0.0
        %v627 = vmax.f32 %v527, 0.0
        %v628 = vmax.f32 %v532, 0.0
        %v629 = vmax.f32 %v535, 0.0
        %v630 = vmax.f32 %v540, 0.0
        %v631 = vmax.f32 %v543, 0.0
        %v632 = vmax.f32 %v548, 0.0
        %v633 = vmax.f32 %v551, 0.0
        %v634 = vmax.f32 %v556, 0.0
        %v635 = vmax.f32 %v559, 0.0
        %v636 = vmax.f32 %v564, 0.0
        %v637 = vmax.f32 %v567, 0.0
        %v638 = vmax.f32 %v572, 0.0
        %v639 = vmax.f32 %v575, 0.0
        %v640 = vmax.f32 %v580, 0.0
        %v641 = vmax.f32 %v583, 0.0
        %v642 = vmax.f32 %v588, 0.0
        %v643 = vmax.f32 %v591, 0.0
        %v644 = vmax.f32 %v596, 0.0
        %v645 = vmax.f32 %v599, 0.0
        %v646 = vmax.f32 %v604, 0.0
        %v647 = vmax.f32 %v607, 0.0
        %v648 = vmax.f32 %v612, 0.0
        %v649 = vmax.f32 %v615, 0.0
        %v650 = vpack.c.bf16 %v619, %v618
        %v651 = vpack.c.bf16 %v621, %v620
        %v652 = vpack.c.bf16 %v623, %v622
        %v653 = vpack.c.bf16 %v625, %v624
        %v654 = vpack.c.bf16 %v627, %v626
        %v655 = vpack.c.bf16 %v629, %v628
        %v656 = vpack.c.bf16 %v631, %v630
        %v657 = vpack.c.bf16 %v633, %v632
        %v658 = vpack.c.bf16 %v635, %v634
        %v659 = vpack.c.bf16 %v637, %v636
        %v660 = vpack.c.bf16 %v639, %v638
        %v661 = vpack.c.bf16 %v641, %v640
        %v662 = vpack.c.bf16 %v643, %v642
        %v663 = vpack.c.bf16 %v645, %v644
        %v664 = vpack.c.bf16 %v647, %v646
        %v665 = vpack.c.bf16 %v649, %v648
        %v666 = vld [vmem:[%s3] sm:$0xf]
        %v667 = vld [vmem:[%s3 + $0x4] sm:$0xf]
        %v668 = vld [vmem:[%s3 + $0x8] sm:$0xf]
        %v669 = vld [vmem:[%s3 + $0xc] sm:$0xf]
        %v670 = vld [vmem:[%s3 + $0x10] sm:$0xf]
        %v671 = vld [vmem:[%s3 + $0x14] sm:$0xf]
        %v672 = vld [vmem:[%s3 + $0x18] sm:$0xf]
        %v673 = vld [vmem:[%s3 + $0x1c] sm:$0xf]
        %v674 = vld [vmem:[%s4] sm:$0x1]
        %v676 = vlaneseq
        %v677 = vshrl.u32 %v676, 7
        %v678 = vsub.s32 0, %v677
        %v679 = vrot.slane %v674, %v678
        %v689 = vunpack.c.l.b16 %v666
        %v690 = vunpack.c.l.b16 %v667
        %v691 = vunpack.c.l.b16 %v668
        %v692 = vunpack.c.l.b16 %v669
        %v693 = vunpack.c.l.b16 %v670
        %v694 = vunpack.c.l.b16 %v671
        %v695 = vunpack.c.l.b16 %v672
        %v696 = vunpack.c.l.b16 %v673
        %v697 = vpack.c.b16 %v690, %v689
        %v698 = vpack.c.b16 %v692, %v691
        %v699 = vpack.c.b16 %v694, %v693
        %v700 = vpack.c.b16 %v696, %v695
        %vm705 = vcmask 523264
        %v707 = vsel %vm705, %v650, 0
        %v710 = vsel %vm705, %v651, 0
        %v713 = vsel %vm705, %v652, 0
        %v716 = vsel %vm705, %v653, 0
        %v719 = vsel %vm705, %v654, 0
        %v722 = vsel %vm705, %v655, 0
        %v725 = vsel %vm705, %v656, 0
        %v728 = vsel %vm705, %v657, 0
        %v731 = vsel %vm705, %v658, 0
        %v734 = vsel %vm705, %v659, 0
        %v737 = vsel %vm705, %v660, 0
        %v740 = vsel %vm705, %v661, 0
        %v743 = vsel %vm705, %v662, 0
        %v746 = vsel %vm705, %v663, 0
        %v749 = vsel %vm705, %v664, 0
        %v752 = vsel %vm705, %v665, 0
        %754 = vmatprep.subr.bf16.mxu0 0
        %755 = vmatpush1.bf16.msra.mxu0 0
        %756 = vmatprep.subr.bf16.mxu0 0
        %757 = vmatpush1.bf16.msra.mxu0 0
        %758 = vmatprep.subr.bf16.mxu0 0
        %759 = vmatpush1.bf16.msra.mxu0 0
        %760 = vmatprep.subr.bf16.mxu0 0
        %761 = vmatpush1.bf16.msra.mxu0 0
        %762 = vmatprep.subr.bf16.mxu0 0
        %763 = vmatpush1.bf16.msra.mxu0 %v700
        %764 = vmatprep.subr.bf16.mxu0 0
        %765 = vmatpush1.bf16.msra.mxu0 %v699
        %766 = vmatprep.subr.bf16.mxu0 0
        %767 = vmatpush1.bf16.msra.mxu0 %v698
        %768 = vmatprep.subr.bf16.mxu0 0
        %769 = vmatpush1.bf16.msra.mxu0 %v697
        %770 = vmatprep.subr.bf16.mxu0 0
        %771 = vmatpush2.bf16.msra.mxu0 0
        %772 = vmatprep.subr.bf16.mxu0 0
        %773 = vmatpush2.bf16.msra.mxu0 0
        %774 = vmatprep.subr.bf16.mxu0 0
        %775 = vmatpush2.bf16.msra.mxu0 0
        %776 = vmatprep.subr.bf16.mxu0 0
        %777 = vmatpush2.bf16.msra.mxu0 0
        %778 = vmatprep.subr.bf16.mxu0 0
        %779 = vmatpush2.bf16.msra.mxu0 0
        %780 = vmatprep.subr.bf16.mxu0 0
        %781 = vmatpush2.bf16.msra.mxu0 0
        %782 = vmatprep.subr.bf16.mxu0 0
        %783 = vmatpush2.bf16.msra.mxu0 0
        %784 = vmatprep.subr.bf16.mxu0 0
        %785 = vmatpush2.bf16.msra.mxu0 0
        %786 = vmatprep.mubr.bf16.mxu0 0
        %787 = vmatmul.mubr.bf16.gmra.mxu0 %v707
        %v788 = vpop.f32.mrf.mxu0
        %v789 = vadd.f32 %v679, %v788
        %v790 = vpop.f32.mrf.mxu0
        %v791 = vpop.f32.mrf.mxu0
        %v792 = vadd.f32 %v679, %v791
        %v793 = vpop.f32.mrf.mxu0
        %794 = vmatprep.mubr.bf16.mxu0 0
        %795 = vmatmul.mubr.bf16.gmra.mxu0 %v710
        %v796 = vpop.f32.mrf.mxu0
        %v797 = vadd.f32 %v679, %v796
        %v798 = vpop.f32.mrf.mxu0
        %v799 = vpop.f32.mrf.mxu0
        %v800 = vadd.f32 %v679, %v799
        %v801 = vpop.f32.mrf.mxu0
        %802 = vmatprep.mubr.bf16.mxu0 0
        %803 = vmatmul.mubr.bf16.gmra.mxu0 %v713
        %v804 = vpop.f32.mrf.mxu0
        %v805 = vadd.f32 %v679, %v804
        %v806 = vpop.f32.mrf.mxu0
        %v807 = vpop.f32.mrf.mxu0
        %v808 = vadd.f32 %v679, %v807
        %v809 = vpop.f32.mrf.mxu0
        %810 = vmatprep.mubr.bf16.mxu0 0
        %811 = vmatmul.mubr.bf16.gmra.mxu0 %v716
        %v812 = vpop.f32.mrf.mxu0
        %v813 = vadd.f32 %v679, %v812
        %v814 = vpop.f32.mrf.mxu0
        %v815 = vpop.f32.mrf.mxu0
        %v816 = vadd.f32 %v679, %v815
        %v817 = vpop.f32.mrf.mxu0
        %818 = vmatprep.mubr.bf16.mxu0 0
        %819 = vmatmul.mubr.bf16.gmra.mxu0 %v719
        %v820 = vpop.f32.mrf.mxu0
        %v821 = vadd.f32 %v679, %v820
        %v822 = vpop.f32.mrf.mxu0
        %v823 = vpop.f32.mrf.mxu0
        %v824 = vadd.f32 %v679, %v823
        %v825 = vpop.f32.mrf.mxu0
        %826 = vmatprep.mubr.bf16.mxu0 0
        %827 = vmatmul.mubr.bf16.gmra.mxu0 %v722
        %v828 = vpop.f32.mrf.mxu0
        %v829 = vadd.f32 %v679, %v828
        %v830 = vpop.f32.mrf.mxu0
        %v831 = vpop.f32.mrf.mxu0
        %v832 = vadd.f32 %v679, %v831
        %v833 = vpop.f32.mrf.mxu0
        %834 = vmatprep.mubr.bf16.mxu0 0
        %835 = vmatmul.mubr.bf16.gmra.mxu0 %v725
        %v836 = vpop.f32.mrf.mxu0
        %v837 = vadd.f32 %v679, %v836
        %v838 = vpop.f32.mrf.mxu0
        %v839 = vpop.f32.mrf.mxu0
        %v840 = vadd.f32 %v679, %v839
        %v841 = vpop.f32.mrf.mxu0
        %842 = vmatprep.mubr.bf16.mxu0 0
        %843 = vmatmul.mubr.bf16.gmra.mxu0 %v728
        %v844 = vpop.f32.mrf.mxu0
        %v845 = vadd.f32 %v679, %v844
        %v846 = vpop.f32.mrf.mxu0
        %v847 = vpop.f32.mrf.mxu0
        %v848 = vadd.f32 %v679, %v847
        %v849 = vpop.f32.mrf.mxu0
        %850 = vmatprep.mubr.bf16.mxu0 0
        %851 = vmatmul.mubr.bf16.gmra.mxu0 %v731
        %v852 = vpop.f32.mrf.mxu0
        %v853 = vadd.f32 %v679, %v852
        %v854 = vpop.f32.mrf.mxu0
        %v855 = vpop.f32.mrf.mxu0
        %v856 = vadd.f32 %v679, %v855
        %v857 = vpop.f32.mrf.mxu0
        %858 = vmatprep.mubr.bf16.mxu0 0
        %859 = vmatmul.mubr.bf16.gmra.mxu0 %v734
        %v860 = vpop.f32.mrf.mxu0
        %v861 = vadd.f32 %v679, %v860
        %v862 = vpop.f32.mrf.mxu0
        %v863 = vpop.f32.mrf.mxu0
        %v864 = vadd.f32 %v679, %v863
        %v865 = vpop.f32.mrf.mxu0
        %866 = vmatprep.mubr.bf16.mxu0 0
        %867 = vmatmul.mubr.bf16.gmra.mxu0 %v737
        %v868 = vpop.f32.mrf.mxu0
        %v869 = vadd.f32 %v679, %v868
        %v870 = vpop.f32.mrf.mxu0
        %v871 = vpop.f32.mrf.mxu0
        %v872 = vadd.f32 %v679, %v871
        %v873 = vpop.f32.mrf.mxu0
        %874 = vmatprep.mubr.bf16.mxu0 0
        %875 = vmatmul.mubr.bf16.gmra.mxu0 %v740
        %v876 = vpop.f32.mrf.mxu0
        %v877 = vadd.f32 %v679, %v876
        %v878 = vpop.f32.mrf.mxu0
        %v879 = vpop.f32.mrf.mxu0
        %v880 = vadd.f32 %v679, %v879
        %v881 = vpop.f32.mrf.mxu0
        %882 = vmatprep.mubr.bf16.mxu0 0
        %883 = vmatmul.mubr.bf16.gmra.mxu0 %v743
        %v884 = vpop.f32.mrf.mxu0
        %v885 = vadd.f32 %v679, %v884
        %v886 = vpop.f32.mrf.mxu0
        %v887 = vpop.f32.mrf.mxu0
        %v888 = vadd.f32 %v679, %v887
        %v889 = vpop.f32.mrf.mxu0
        %890 = vmatprep.mubr.bf16.mxu0 0
        %891 = vmatmul.mubr.bf16.gmra.mxu0 %v746
        %v892 = vpop.f32.mrf.mxu0
        %v893 = vadd.f32 %v679, %v892
        %v894 = vpop.f32.mrf.mxu0
        %v895 = vpop.f32.mrf.mxu0
        %v896 = vadd.f32 %v679, %v895
        %v897 = vpop.f32.mrf.mxu0
        %898 = vmatprep.mubr.bf16.mxu0 0
        %899 = vmatmul.mubr.bf16.gmra.mxu0 %v749
        %v900 = vpop.f32.mrf.mxu0
        %v901 = vadd.f32 %v679, %v900
        %v902 = vpop.f32.mrf.mxu0
        %v903 = vpop.f32.mrf.mxu0
        %v904 = vadd.f32 %v679, %v903
        %v905 = vpop.f32.mrf.mxu0
        %906 = vmatprep.mubr.bf16.mxu0 0
        %907 = vmatmul.mubr.bf16.gmra.mxu0 %v752
        %v908 = vpop.f32.mrf.mxu0
        %v909 = vadd.f32 %v679, %v908
        %v910 = vpop.f32.mrf.mxu0
        %v911 = vpop.f32.mrf.mxu0
        %v912 = vadd.f32 %v679, %v911
        %v913 = vpop.f32.mrf.mxu0
        %914 = vdwg.mxu0
        %v915 = vmax.f32 %v789, 0.0
        %v916 = vmax.f32 %v792, 0.0
        %v917 = vmax.f32 %v797, 0.0
        %v918 = vmax.f32 %v800, 0.0
        %v919 = vmax.f32 %v805, 0.0
        %v920 = vmax.f32 %v808, 0.0
        %v921 = vmax.f32 %v813, 0.0
        %v922 = vmax.f32 %v816, 0.0
        %v923 = vmax.f32 %v821, 0.0
        %v924 = vmax.f32 %v824, 0.0
        %v925 = vmax.f32 %v829, 0.0
        %v926 = vmax.f32 %v832, 0.0
        %v927 = vmax.f32 %v837, 0.0
        %v928 = vmax.f32 %v840, 0.0
        %v929 = vmax.f32 %v845, 0.0
        %v930 = vmax.f32 %v848, 0.0
        %v931 = vmax.f32 %v853, 0.0
        %v932 = vmax.f32 %v856, 0.0
        %v933 = vmax.f32 %v861, 0.0
        %v934 = vmax.f32 %v864, 0.0
        %v935 = vmax.f32 %v869, 0.0
        %v936 = vmax.f32 %v872, 0.0
        %v937 = vmax.f32 %v877, 0.0
        %v938 = vmax.f32 %v880, 0.0
        %v939 = vmax.f32 %v885, 0.0
        %v940 = vmax.f32 %v888, 0.0
        %v941 = vmax.f32 %v893, 0.0
        %v942 = vmax.f32 %v896, 0.0
        %v943 = vmax.f32 %v901, 0.0
        %v944 = vmax.f32 %v904, 0.0
        %v945 = vmax.f32 %v909, 0.0
        %v946 = vmax.f32 %v912, 0.0
        %v947 = vpack.c.bf16 %v916, %v915
        %v948 = vpack.c.bf16 %v918, %v917
        %v949 = vpack.c.bf16 %v920, %v919
        %v950 = vpack.c.bf16 %v922, %v921
        %v951 = vpack.c.bf16 %v924, %v923
        %v952 = vpack.c.bf16 %v926, %v925
        %v953 = vpack.c.bf16 %v928, %v927
        %v954 = vpack.c.bf16 %v930, %v929
        %v955 = vpack.c.bf16 %v932, %v931
        %v956 = vpack.c.bf16 %v934, %v933
        %v957 = vpack.c.bf16 %v936, %v935
        %v958 = vpack.c.bf16 %v938, %v937
        %v959 = vpack.c.bf16 %v940, %v939
        %v960 = vpack.c.bf16 %v942, %v941
        %v961 = vpack.c.bf16 %v944, %v943
        %v962 = vpack.c.bf16 %v946, %v945
        %v963 = vld [vmem:[%s5] sm:$0xf]
        %v964 = vld [vmem:[%s5 + $0x4] sm:$0xf]
        %v965 = vld [vmem:[%s5 + $0x8] sm:$0xf]
        %v966 = vld [vmem:[%s5 + $0xc] sm:$0xf]
        %v967 = vld [vmem:[%s5 + $0x10] sm:$0xf]
        %v968 = vld [vmem:[%s5 + $0x14] sm:$0xf]
        %v969 = vld [vmem:[%s5 + $0x18] sm:$0xf]
        %v970 = vld [vmem:[%s5 + $0x1c] sm:$0xf]
        %v971 = vld [vmem:[%s6] sm:$0x1]
        %v973 = vlaneseq
        %v974 = vshrl.u32 %v973, 7
        %v975 = vsub.s32 0, %v974
        %v976 = vrot.slane %v971, %v975
        %v986 = vunpack.c.l.b16 %v963
        %v987 = vunpack.c.l.b16 %v964
        %v988 = vunpack.c.l.b16 %v965
        %v989 = vunpack.c.l.b16 %v966
        %v990 = vunpack.c.l.b16 %v967
        %v991 = vunpack.c.l.b16 %v968
        %v992 = vunpack.c.l.b16 %v969
        %v993 = vunpack.c.l.b16 %v970
        %v994 = vpack.c.b16 %v987, %v986
        %v995 = vpack.c.b16 %v989, %v988
        %v996 = vpack.c.b16 %v991, %v990
        %v997 = vpack.c.b16 %v993, %v992
        %v1003 = vsel %vm705, %v947, 0
        %v1006 = vsel %vm705, %v948, 0
        %v1009 = vsel %vm705, %v949, 0
        %v1012 = vsel %vm705, %v950, 0
        %v1015 = vsel %vm705, %v951, 0
        %v1018 = vsel %vm705, %v952, 0
        %v1021 = vsel %vm705, %v953, 0
        %v1024 = vsel %vm705, %v954, 0
        %v1027 = vsel %vm705, %v955, 0
        %v1030 = vsel %vm705, %v956, 0
        %v1033 = vsel %vm705, %v957, 0
        %v1036 = vsel %vm705, %v958, 0
        %v1039 = vsel %vm705, %v959, 0
        %v1042 = vsel %vm705, %v960, 0
        %v1045 = vsel %vm705, %v961, 0
        %v1048 = vsel %vm705, %v962, 0
        %1050 = vmatprep.subr.bf16.mxu0 0
        %1051 = vmatpush1.bf16.msra.mxu0 0
        %1052 = vmatprep.subr.bf16.mxu0 0
        %1053 = vmatpush1.bf16.msra.mxu0 0
        %1054 = vmatprep.subr.bf16.mxu0 0
        %1055 = vmatpush1.bf16.msra.mxu0 0
        %1056 = vmatprep.subr.bf16.mxu0 0
        %1057 = vmatpush1.bf16.msra.mxu0 0
        %1058 = vmatprep.subr.bf16.mxu0 0
        %1059 = vmatpush1.bf16.msra.mxu0 %v997
        %1060 = vmatprep.subr.bf16.mxu0 0
        %1061 = vmatpush1.bf16.msra.mxu0 %v996
        %1062 = vmatprep.subr.bf16.mxu0 0
        %1063 = vmatpush1.bf16.msra.mxu0 %v995
        %1064 = vmatprep.subr.bf16.mxu0 0
        %1065 = vmatpush1.bf16.msra.mxu0 %v994
        %1066 = vmatprep.subr.bf16.mxu0 0
        %1067 = vmatpush2.bf16.msra.mxu0 0
        %1068 = vmatprep.subr.bf16.mxu0 0
        %1069 = vmatpush2.bf16.msra.mxu0 0
        %1070 = vmatprep.subr.bf16.mxu0 0
        %1071 = vmatpush2.bf16.msra.mxu0 0
        %1072 = vmatprep.subr.bf16.mxu0 0
        %1073 = vmatpush2.bf16.msra.mxu0 0
        %1074 = vmatprep.subr.bf16.mxu0 0
        %1075 = vmatpush2.bf16.msra.mxu0 0
        %1076 = vmatprep.subr.bf16.mxu0 0
        %1077 = vmatpush2.bf16.msra.mxu0 0
        %1078 = vmatprep.subr.bf16.mxu0 0
        %1079 = vmatpush2.bf16.msra.mxu0 0
        %1080 = vmatprep.subr.bf16.mxu0 0
        %1081 = vmatpush2.bf16.msra.mxu0 0
        %1082 = vmatprep.mubr.bf16.mxu0 0
        %1083 = vmatmul.mubr.bf16.gmra.mxu0 %v1003
        %v1084 = vpop.f32.mrf.mxu0
        %v1085 = vadd.f32 %v976, %v1084
        %v1086 = vpop.f32.mrf.mxu0
        %v1087 = vpop.f32.mrf.mxu0
        %v1088 = vadd.f32 %v976, %v1087
        %v1089 = vpop.f32.mrf.mxu0
        %1090 = vmatprep.mubr.bf16.mxu0 0
        %1091 = vmatmul.mubr.bf16.gmra.mxu0 %v1006
        %v1092 = vpop.f32.mrf.mxu0
        %v1093 = vadd.f32 %v976, %v1092
        %v1094 = vpop.f32.mrf.mxu0
        %v1095 = vpop.f32.mrf.mxu0
        %v1096 = vadd.f32 %v976, %v1095
        %v1097 = vpop.f32.mrf.mxu0
        %1098 = vmatprep.mubr.bf16.mxu0 0
        %1099 = vmatmul.mubr.bf16.gmra.mxu0 %v1009
        %v1100 = vpop.f32.mrf.mxu0
        %v1101 = vadd.f32 %v976, %v1100
        %v1102 = vpop.f32.mrf.mxu0
        %v1103 = vpop.f32.mrf.mxu0
        %v1104 = vadd.f32 %v976, %v1103
        %v1105 = vpop.f32.mrf.mxu0
        %1106 = vmatprep.mubr.bf16.mxu0 0
        %1107 = vmatmul.mubr.bf16.gmra.mxu0 %v1012
        %v1108 = vpop.f32.mrf.mxu0
        %v1109 = vadd.f32 %v976, %v1108
        %v1110 = vpop.f32.mrf.mxu0
        %v1111 = vpop.f32.mrf.mxu0
        %v1112 = vadd.f32 %v976, %v1111
        %v1113 = vpop.f32.mrf.mxu0
        %1114 = vmatprep.mubr.bf16.mxu0 0
        %1115 = vmatmul.mubr.bf16.gmra.mxu0 %v1015
        %v1116 = vpop.f32.mrf.mxu0
        %v1117 = vadd.f32 %v976, %v1116
        %v1118 = vpop.f32.mrf.mxu0
        %v1119 = vpop.f32.mrf.mxu0
        %v1120 = vadd.f32 %v976, %v1119
        %v1121 = vpop.f32.mrf.mxu0
        %1122 = vmatprep.mubr.bf16.mxu0 0
        %1123 = vmatmul.mubr.bf16.gmra.mxu0 %v1018
        %v1124 = vpop.f32.mrf.mxu0
        %v1125 = vadd.f32 %v976, %v1124
        %v1126 = vpop.f32.mrf.mxu0
        %v1127 = vpop.f32.mrf.mxu0
        %v1128 = vadd.f32 %v976, %v1127
        %v1129 = vpop.f32.mrf.mxu0
        %1130 = vmatprep.mubr.bf16.mxu0 0
        %1131 = vmatmul.mubr.bf16.gmra.mxu0 %v1021
        %v1132 = vpop.f32.mrf.mxu0
        %v1133 = vadd.f32 %v976, %v1132
        %v1134 = vpop.f32.mrf.mxu0
        %v1135 = vpop.f32.mrf.mxu0
        %v1136 = vadd.f32 %v976, %v1135
        %v1137 = vpop.f32.mrf.mxu0
        %1138 = vmatprep.mubr.bf16.mxu0 0
        %1139 = vmatmul.mubr.bf16.gmra.mxu0 %v1024
        %v1140 = vpop.f32.mrf.mxu0
        %v1141 = vadd.f32 %v976, %v1140
        %v1142 = vpop.f32.mrf.mxu0
        %v1143 = vpop.f32.mrf.mxu0
        %v1144 = vadd.f32 %v976, %v1143
        %v1145 = vpop.f32.mrf.mxu0
        %1146 = vmatprep.mubr.bf16.mxu0 0
        %1147 = vmatmul.mubr.bf16.gmra.mxu0 %v1027
        %v1148 = vpop.f32.mrf.mxu0
        %v1149 = vadd.f32 %v976, %v1148
        %v1150 = vpop.f32.mrf.mxu0
        %v1151 = vpop.f32.mrf.mxu0
        %v1152 = vadd.f32 %v976, %v1151
        %v1153 = vpop.f32.mrf.mxu0
        %1154 = vmatprep.mubr.bf16.mxu0 0
        %1155 = vmatmul.mubr.bf16.gmra.mxu0 %v1030
        %v1156 = vpop.f32.mrf.mxu0
        %v1157 = vadd.f32 %v976, %v1156
        %v1158 = vpop.f32.mrf.mxu0
        %v1159 = vpop.f32.mrf.mxu0
        %v1160 = vadd.f32 %v976, %v1159
        %v1161 = vpop.f32.mrf.mxu0
        %1162 = vmatprep.mubr.bf16.mxu0 0
        %1163 = vmatmul.mubr.bf16.gmra.mxu0 %v1033
        %v1164 = vpop.f32.mrf.mxu0
        %v1165 = vadd.f32 %v976, %v1164
        %v1166 = vpop.f32.mrf.mxu0
        %v1167 = vpop.f32.mrf.mxu0
        %v1168 = vadd.f32 %v976, %v1167
        %v1169 = vpop.f32.mrf.mxu0
        %1170 = vmatprep.mubr.bf16.mxu0 0
        %1171 = vmatmul.mubr.bf16.gmra.mxu0 %v1036
        %v1172 = vpop.f32.mrf.mxu0
        %v1173 = vadd.f32 %v976, %v1172
        %v1174 = vpop.f32.mrf.mxu0
        %v1175 = vpop.f32.mrf.mxu0
        %v1176 = vadd.f32 %v976, %v1175
        %v1177 = vpop.f32.mrf.mxu0
        %1178 = vmatprep.mubr.bf16.mxu0 0
        %1179 = vmatmul.mubr.bf16.gmra.mxu0 %v1039
        %v1180 = vpop.f32.mrf.mxu0
        %v1181 = vadd.f32 %v976, %v1180
        %v1182 = vpop.f32.mrf.mxu0
        %v1183 = vpop.f32.mrf.mxu0
        %v1184 = vadd.f32 %v976, %v1183
        %v1185 = vpop.f32.mrf.mxu0
        %1186 = vmatprep.mubr.bf16.mxu0 0
        %1187 = vmatmul.mubr.bf16.gmra.mxu0 %v1042
        %v1188 = vpop.f32.mrf.mxu0
        %v1189 = vadd.f32 %v976, %v1188
        %v1190 = vpop.f32.mrf.mxu0
        %v1191 = vpop.f32.mrf.mxu0
        %v1192 = vadd.f32 %v976, %v1191
        %v1193 = vpop.f32.mrf.mxu0
        %1194 = vmatprep.mubr.bf16.mxu0 0
        %1195 = vmatmul.mubr.bf16.gmra.mxu0 %v1045
        %v1196 = vpop.f32.mrf.mxu0
        %v1197 = vadd.f32 %v976, %v1196
        %v1198 = vpop.f32.mrf.mxu0
        %v1199 = vpop.f32.mrf.mxu0
        %v1200 = vadd.f32 %v976, %v1199
        %v1201 = vpop.f32.mrf.mxu0
        %1202 = vmatprep.mubr.bf16.mxu0 0
        %1203 = vmatmul.mubr.bf16.gmra.mxu0 %v1048
        %v1204 = vpop.f32.mrf.mxu0
        %v1205 = vadd.f32 %v976, %v1204
        %v1206 = vpop.f32.mrf.mxu0
        %v1207 = vpop.f32.mrf.mxu0
        %v1208 = vadd.f32 %v976, %v1207
        %v1209 = vpop.f32.mrf.mxu0
        %1210 = vdwg.mxu0
        %1211 = vst [vmem:[%s272] sm:$0xff] %v1085
        %1212 = vst [vmem:[%s272 + $0x8] sm:$0xff] %v1088
        %1213 = vst [vmem:[%s272 + $0x10] sm:$0xff] %v1093
        %1214 = vst [vmem:[%s272 + $0x18] sm:$0xff] %v1096
        %1215 = vst [vmem:[%s272 + $0x20] sm:$0xff] %v1101
        %1216 = vst [vmem:[%s272 + $0x28] sm:$0xff] %v1104
        %1217 = vst [vmem:[%s272 + $0x30] sm:$0xff] %v1109
        %1218 = vst [vmem:[%s272 + $0x38] sm:$0xff] %v1112
        %1219 = vst [vmem:[%s272 + $0x40] sm:$0xff] %v1117
        %1220 = vst [vmem:[%s272 + $0x48] sm:$0xff] %v1120
        %1221 = vst [vmem:[%s272 + $0x50] sm:$0xff] %v1125
        %1222 = vst [vmem:[%s272 + $0x58] sm:$0xff] %v1128
        %1223 = vst [vmem:[%s272 + $0x60] sm:$0xff] %v1133
        %1224 = vst [vmem:[%s272 + $0x68] sm:$0xff] %v1136
        %1225 = vst [vmem:[%s272 + $0x70] sm:$0xff] %v1141
        %1226 = vst [vmem:[%s272 + $0x78] sm:$0xff] %v1144
        %1227 = vst [vmem:[%s272 + $0x80] sm:$0xff] %v1149
        %1228 = vst [vmem:[%s272 + $0x88] sm:$0xff] %v1152
        %1229 = vst [vmem:[%s272 + $0x90] sm:$0xff] %v1157
        %1230 = vst [vmem:[%s272 + $0x98] sm:$0xff] %v1160
        %1231 = vst [vmem:[%s272 + $0xa0] sm:$0xff] %v1165
        %1232 = vst [vmem:[%s272 + $0xa8] sm:$0xff] %v1168
        %1233 = vst [vmem:[%s272 + $0xb0] sm:$0xff] %v1173
        %1234 = vst [vmem:[%s272 + $0xb8] sm:$0xff] %v1176
        %1235 = vst [vmem:[%s272 + $0xc0] sm:$0xff] %v1181
        %1236 = vst [vmem:[%s272 + $0xc8] sm:$0xff] %v1184
        %1237 = vst [vmem:[%s272 + $0xd0] sm:$0xff] %v1189
        %1238 = vst [vmem:[%s272 + $0xd8] sm:$0xff] %v1192
        %1239 = vst [vmem:[%s272 + $0xe0] sm:$0xff] %v1197
        %1240 = vst [vmem:[%s272 + $0xe8] sm:$0xff] %v1200
        %1241 = vst [vmem:[%s272 + $0xf0] sm:$0xff] %v1205
        %1242 = vst [vmem:[%s272 + $0xf8] sm:$0xff] %v1208
        %s1243 = sand.u32 %s181, 1
        %s1244 = scalar_lea.sflag [#allocation3], %s1243
        %s1245 = sand.u32 %s181, 1
        %s1246 = smul.addr %s1245, 256
        %s1247 = scalar_lea.vmem [#allocation2], %s1246
        // Predicated region
        $region49: #{tpu_custom_call.1} parent=47 // pred_check
          %p1248 = pneg %p191
        $region50: #{tpu_custom_call.1} parent=47 // pred_check_branch
          %1250 = sbr.rel (%p1248) target = $region52
        $region51: #{tpu_custom_call.1} parent=47 // pred_region
          %s1251 = smul.u32 32, %s21
          %s1253 = ssub.s32 4096, 4096
          %1254 = vsyncadd %s1244, %s1253
          %s1255 = smul.addr %s1251, 128
          %s1256 = scalar_lea.hbm %s7, %s1255
          %s1257 = sshll.u32 %s1247, 4
          %s1258 = int_to_ptr.vmem [resolvable:$true] %s1257
          %1263 = dma.vmem_to_hbm [thread:$0]  %s1258, 4096, %s1256, %s1244, 128, 128, 8
        $region52: #{tpu_custom_call.1} parent=47 // pred_fallthru
          _
      $region48: #{tpu_custom_call.1} parent=5 // pred_fallthru
        _
      %p1264 = scmp.le.s32.totalorder 2, %s16
      // Predicated region
      $region53: #{tpu_custom_call.1} parent=5 // pred_check
        %p1265 = pneg %p1264
      $region54: #{tpu_custom_call.1} parent=5 // pred_check_branch
        %1267 = sbr.rel (%p1265) target = $region56
      $region55: #{tpu_custom_call.1} parent=5 // pred_region
        %s1268 = ssub.s32 %s16, 2
        // Predicated region
        $region57: #{tpu_custom_call.1} parent=55 // pred_check
          %p1269 = pneg %p197
        $region58: #{tpu_custom_call.1} parent=55 // pred_check_branch
          %1271 = sbr.rel (%p1269) target = $region60
        $region59: #{tpu_custom_call.1} parent=55 // pred_region
          %s1272 = sand.u32 %s182, 1
          %s1273 = scalar_lea.sflag [#allocation3], %s1272
          %s1274 = sand.u32 %s182, 1
          %s1275 = smul.addr %s1274, 256
          %s1276 = scalar_lea.vmem [#allocation2], %s1275
          %1277 = dma.done %s1273, 4096
        $region60: #{tpu_custom_call.1} parent=55 // pred_fallthru
          _
      $region56: #{tpu_custom_call.1} parent=5 // pred_fallthru
        _
    $region6: #{tpu_custom_call.1} parent=1 // loop_footer
      %s20 = sadd.s32 1, %s16
    $region7: #{tpu_custom_call.1} parent=1 // loop_footer_branch
      %15 = sbr.rel target = $region3
    $region8: #{tpu_custom_call.1} parent=1 // loop_exit
      _
    %1278 = vsyncpa [#allocation3], 1
    %s1279 = scalar_lea.sflag [#allocation3], 1
    %1280 = vsyncpa %s1279, 1

</llo_original>
